<compile_context>
chip_gen: v7x
topology: tpu7x:2x2x1
jax: 0.10.0
libtpu: 0.0.40
codegen_flags: <defaults>
</compile_context>

<pallas_src>
import functools

import jax
import jax.numpy as jnp
from jax import lax
from jax.experimental import pallas as pl
from jax.experimental.pallas import tpu as pltpu

N_EMBD = 384       # module's n_embd
BLOCK_SIZE = 256   # module's block_size (tril buffer caps T)


def _head_kernel(x_ref, wqkv_ref, o_ref, *, head_size):
    H = head_size
    Bb, T, C = x_ref.shape

    # ---- fused QKV projection on (Bb*T, C) rows: one bf16 MXU matmul, f32 acc.
    # (collapsing the leading dims is layout-free; C stays the lane dim)
    x2d = x_ref[...].reshape(Bb * T, C).astype(jnp.bfloat16)
    w = wqkv_ref[...]                                              # (C, 3H) bf16
    qkv = jnp.dot(x2d, w, preferred_element_type=jnp.float32)      # (Bb*T, 3H) f32
    qkv = qkv.astype(jnp.bfloat16)                                 # single downcast

    # Weight columns are packed [k | q_scaled | v]; q already carries C**-0.5.
    k = qkv[:, 0 * H:1 * H].reshape(Bb, T, H)
    q = qkv[:, 1 * H:2 * H].reshape(Bb, T, H)
    v = qkv[:, 2 * H:3 * H].reshape(Bb, T, H)

    # ---- scores: contract the head dim directly (no materialized k.T).
    wei = lax.dot_general(
        q, k,
        dimension_numbers=(((2,), (2,)), ((0,), (0,))),
        preferred_element_type=jnp.float32)                        # (Bb, T, T) f32

    # ---- causal (lower-triangular) mask == tril[:T, :T]
    row = lax.broadcasted_iota(jnp.int32, (T, T), 0)
    col = lax.broadcasted_iota(jnp.int32, (T, T), 1)
    wei = jnp.where((col <= row)[None, :, :], wei, -jnp.inf)

    # ---- numerically stable softmax in f32, normalization deferred past the
    # PV matmul (T*H multiplies instead of T*T).
    m = jnp.max(wei, axis=-1, keepdims=True)                       # finite: diag unmasked
    e = jnp.exp(wei - m)                                           # (Bb, T, T) f32
    denom = jnp.sum(e, axis=-1, keepdims=True)                     # (Bb, T, 1)

    # dropout: identity in eval mode.

    # ---- weighted sum over V (bf16 operands, f32 accumulation), then normalize.
    out = lax.dot_general(
        e.astype(jnp.bfloat16), v,
        dimension_numbers=(((2,), (1,)), ((0,), (0,))),
        preferred_element_type=jnp.float32)                        # (Bb, T, H) f32
    out = out * pl.reciprocal(denom, approx=True)                  # EUP slot

    o_ref[...] = out.astype(o_ref.dtype)


def _pick_batch_block(B, T, target_rows=128, max_rows=1024):
    """Smallest divisor Bb of B with Bb*T >= target_rows (VMEM-capped)."""
    bb = 1
    for cand in range(1, B + 1):
        if B % cand != 0 or cand * T > max_rows:
            continue
        bb = cand
        if cand * T >= target_rows:
            break
    return bb


def head_forward(x, wk, wq, wv):
    """x: (B, T, C) f32; wk/wq/wv: (C, H) f32 -> (B, T, H) f32."""
    B, T, C = x.shape
    H = wk.shape[1]
    assert C == N_EMBD
    assert T <= BLOCK_SIZE  # module's tril buffer caps T; dense (T,T) softmax fits VMEM

    # Fold the module's C**-0.5 score scale into the query weight (one-time,
    # wrapper-side), and fuse the three projections into one (C, 3H) bf16
    # parameter block.  Column order must match kernel slicing: [k | q | v].
    scale = float(C) ** -0.5
    w_qkv = jnp.concatenate([wk, wq * scale, wv], axis=1).astype(jnp.bfloat16)

    Bb = _pick_batch_block(B, T)
    grid = (B // Bb,)

    kernel = functools.partial(_head_kernel, head_size=H)

    return pl.pallas_call(
        kernel,
        out_shape=jax.ShapeDtypeStruct((B, T, H), x.dtype),
        grid_spec=pltpu.PrefetchScalarGridSpec(
            num_scalar_prefetch=0,
            grid=grid,
            in_specs=[
                pl.BlockSpec((Bb, T, C), lambda b: (b, 0, 0)),
                pl.BlockSpec((C, 3 * H), lambda b: (0, 0)),   # resident weights
            ],
            out_specs=pl.BlockSpec((Bb, T, H), lambda b: (b, 0, 0)),
        ),
        compiler_params=pltpu.CompilerParams(
            dimension_semantics=("parallel",),
            # Headroom over v5e's 16 MiB scoped default; safely under v7x's
            # 64 MiB physical VMEM per TensorCore.
            vmem_limit_bytes=32 * 1024 * 1024,
        ),
    )(x, w_qkv)


def _reference(x, wk, wq, wv):
    B, T, C = x.shape
    k = x @ wk
    q = x @ wq
    v = x @ wv
    wei = jnp.einsum("btd,bsd->bts", q, k) * (C ** -0.5)
    mask = jnp.tril(jnp.ones((T, T), dtype=bool))
    wei = jnp.where(mask, wei, -jnp.inf)
    wei = jax.nn.softmax(wei, axis=-1)
    return jnp.einsum("bts,bsd->btd", wei, v)


if __name__ == "__main__":
    B, T, C = 4, 64, N_EMBD     # small shapes; Bb=2 -> 128 rows/step, 2 grid steps
    head_size = 64

    key = jax.random.PRNGKey(0)
    kx, kk, kq, kv = jax.random.split(key, 4)

    x = jax.random.normal(kx, (B, T, C), dtype=jnp.float32)
    # deterministic "Linear(no bias)" weights, stored (in_features, out_features)
    wk = jax.random.normal(kk, (C, head_size), dtype=jnp.float32) * (C ** -0.5)
    wq = jax.random.normal(kq, (C, head_size), dtype=jnp.float32) * (C ** -0.5)
    wv = jax.random.normal(kv, (C, head_size), dtype=jnp.float32) * (C ** -0.5)

    out = jax.block_until_ready(head_forward(x, wk, wq, wv))
    ref = _reference(x, wk, wq, wv)

    assert out.shape == (B, T, head_size)
    # bf16 MXU operands (f32 accumulation + f32 softmax) -> mixed-precision tolerance
    max_err = float(jnp.max(jnp.abs(out - ref)))
    assert jnp.allclose(out, ref, atol=3e-2, rtol=3e-2), f"max abs err {max_err}"

    print("KERNEL_OK")
</pallas_src>

<mosaic_0001>
module attributes {stable_mosaic.version = 11 : i64} {
  func.func @_head_kernel(%arg0: i32, %arg1: memref<2x64x384xf32, #tpu.memory_space<vmem>>, %arg2: memref<384x192xbf16, #tpu.memory_space<vmem>>, %arg3: memref<2x64x64xf32, #tpu.memory_space<vmem>>) attributes {dimension_semantics = [#tpu.dimension_semantics<parallel>], iteration_bounds = array<i64: 2>, scalar_prefetch = 0 : i64, scratch_operands = 0 : i64, tpu.core_type = #tpu.core_type<tc>, window_params = [{transform_indices = @transform_0, window_bounds = array<i64: 2, 64, 384>}, {pipeline_mode = #tpu.pipeline_mode<synchronous>, transform_indices = @transform_1, window_bounds = array<i64: 384, 192>}, {transform_indices = @transform_2, window_bounds = array<i64: 2, 64, 64>}]} {
    %c0 = arith.constant 0 : index
    %c0_0 = arith.constant 0 : index
    %c0_1 = arith.constant 0 : index
    %0 = vector.load %arg1[%c0, %c0_0, %c0_1] : memref<2x64x384xf32, #tpu.memory_space<vmem>>, vector<2x64x384xf32>
    %1 = vector.shape_cast %0 : vector<2x64x384xf32> to vector<128x384xf32>
    %2 = arith.truncf %1 : vector<128x384xf32> to vector<128x384xbf16>
    %c0_2 = arith.constant 0 : index
    %c0_3 = arith.constant 0 : index
    %3 = vector.load %arg2[%c0_2, %c0_3] : memref<384x192xbf16, #tpu.memory_space<vmem>>, vector<384x192xbf16>
    %cst = arith.constant dense<0.000000e+00> : vector<128x192xf32>
    %4 = tpu.matmul %2, %3, %cst {dimension_numbers = #tpu.dot_dimension_numbers<[1], [0], [0], [1], [0, 0, 1, 1], [], []>} : vector<128x384xbf16>, vector<384x192xbf16>, vector<128x192xf32> -> vector<128x192xf32>
    %5 = arith.truncf %4 : vector<128x192xf32> to vector<128x192xbf16>
    %6 = vector.extract_strided_slice %5 {offsets = [0, 0], sizes = [128, 64], strides = [1, 1]} : vector<128x192xbf16> to vector<128x64xbf16>
    %7 = vector.shape_cast %6 : vector<128x64xbf16> to vector<2x64x64xbf16>
    %8 = vector.extract_strided_slice %5 {offsets = [0, 64], sizes = [128, 64], strides = [1, 1]} : vector<128x192xbf16> to vector<128x64xbf16>
    %9 = vector.shape_cast %8 : vector<128x64xbf16> to vector<2x64x64xbf16>
    %10 = vector.extract_strided_slice %5 {offsets = [0, 128], sizes = [128, 64], strides = [1, 1]} : vector<128x192xbf16> to vector<128x64xbf16>
    %11 = vector.shape_cast %10 : vector<128x64xbf16> to vector<2x64x64xbf16>
    %cst_4 = arith.constant dense<0.000000e+00> : vector<2x64x64xf32>
    %12 = tpu.matmul %9, %7, %cst_4 {dimension_numbers = #tpu.dot_dimension_numbers<[2], [2], [1], [1], [0, 0, 0, 1, 1, 1], [0], [0]>} : vector<2x64x64xbf16>, vector<2x64x64xbf16>, vector<2x64x64xf32> -> vector<2x64x64xf32>
    %13 = tpu.iota {dimensions = array<i32: 0>} : vector<64x64xi32>
    %14 = tpu.iota {dimensions = array<i32: 1>} : vector<64x64xi32>
    %15 = arith.cmpi sle, %14, %13 : vector<64x64xi32>
    %16 = vector.shape_cast %15 : vector<64x64xi1> to vector<1x64x64xi1>
    %cst_5 = arith.constant 0xFF800000 : f32
    %17 = vector.shape_cast %16 : vector<1x64x64xi1> to vector<1x64x64xi1>
    %18 = vector.broadcast %17 : vector<1x64x64xi1> to vector<2x64x64xi1>
    %19 = vector.broadcast %cst_5 : f32 to vector<2x64x64xf32>
    %20 = arith.select %18, %12, %19 : vector<2x64x64xi1>, vector<2x64x64xf32>
    %cst_6 = arith.constant dense<0xFF800000> : vector<2x64xf32>
    %21 = vector.multi_reduction <maximumf>, %20, %cst_6 [2] : vector<2x64x64xf32> to vector<2x64xf32>
    %22 = vector.shape_cast %21 : vector<2x64xf32> to vector<2x64x1xf32>
    %23 = vector.broadcast %22 : vector<2x64x1xf32> to vector<2x64x64xf32>
    %24 = arith.subf %20, %23 : vector<2x64x64xf32>
    %25 = math.exp %24 : vector<2x64x64xf32>
    %cst_7 = arith.constant dense<0.000000e+00> : vector<2x64xf32>
    %26 = vector.multi_reduction <add>, %25, %cst_7 [2] : vector<2x64x64xf32> to vector<2x64xf32>
    %27 = vector.shape_cast %26 : vector<2x64xf32> to vector<2x64x1xf32>
    %28 = arith.truncf %25 : vector<2x64x64xf32> to vector<2x64x64xbf16>
    %cst_8 = arith.constant dense<0.000000e+00> : vector<2x64x64xf32>
    %29 = tpu.matmul %28, %11, %cst_8 {dimension_numbers = #tpu.dot_dimension_numbers<[2], [1], [1], [2], [0, 0, 0, 1, 1, 2], [0], [0]>} : vector<2x64x64xbf16>, vector<2x64x64xbf16>, vector<2x64x64xf32> -> vector<2x64x64xf32>
    %30 = tpu.reciprocal %27 {approx = true} : vector<2x64x1xf32> -> vector<2x64x1xf32>
    %31 = vector.broadcast %30 : vector<2x64x1xf32> to vector<2x64x64xf32>
    %32 = arith.mulf %29, %31 : vector<2x64x64xf32>
    %c0_9 = arith.constant 0 : index
    %c0_10 = arith.constant 0 : index
    %c0_11 = arith.constant 0 : index
    %33 = vector.load %arg3[%c0_9, %c0_10, %c0_11] : memref<2x64x64xf32, #tpu.memory_space<vmem>>, vector<2x64x64xf32>
    tpu.vector_store %arg3[%c0_9, %c0_10, %c0_11], %32 {strides = array<i32>} : memref<2x64x64xf32, #tpu.memory_space<vmem>>, vector<2x64x64xf32>,
    return
  }
  func.func @transform_0(%arg0: i32) -> (i32, i32, i32) {
    %c0_i32 = arith.constant 0 : i32
    %c0_i32_0 = arith.constant 0 : i32
    %c0_i32_1 = arith.constant 0 : i32
    return %arg0, %c0_i32, %c0_i32_0 : i32, i32, i32
  }
  func.func @transform_1(%arg0: i32) -> (i32, i32) {
    %c0_i32 = arith.constant 0 : i32
    %c0_i32_0 = arith.constant 0 : i32
    %c0_i32_1 = arith.constant 0 : i32
    return %c0_i32, %c0_i32_0 : i32, i32
  }
  func.func @transform_2(%arg0: i32) -> (i32, i32, i32) {
    %c0_i32 = arith.constant 0 : i32
    %c0_i32_0 = arith.constant 0 : i32
    %c0_i32_1 = arith.constant 0 : i32
    return %arg0, %c0_i32, %c0_i32_0 : i32, i32, i32
  }
}

</mosaic_0001>

<llo_original>
// kernel: tpu_custom_call.1
$region0: #{tpu_custom_call.1}
  #allocation0 [shape = 'u32[]', space=smem, size = 0x4, offset = 0x4, fixed_abs, tag = 'smem constant byte address 0x4 - core index']
  #allocation1 [shape = 'u32[144,128]{1,0:T(1,128)}', space=vmem, size = 0x12000, scoped, tag = 'internal scratch']
  %s0 = inlined_call_operand.hbm [shape: f32[4,64,384], index: 0, kind: input, shape index: {}]
  %s1 = inlined_call_operand.vmem [shape: bf16[384,192], index: 1, kind: input, shape index: {}]
  %s2 = inlined_call_operand.hbm [shape: f32[4,64,64], index: 2, kind: output, shape index: {}]
  %s3 = sld [smem:[#allocation0]]
  $region45: #{tpu_custom_call.1} parent=0
    _
  %s5 = ssub.s32 1, %s3
  %s6 = scalar_select 0, %s5, %s3
  $region1: #{tpu_custom_call.1} parent=0
    #allocation2 [shape = 'u8[393216]{0}', space=vmem, size = 0x60000, scoped, tag = 'input window, operand 0']
    #allocation3 [shape = 's32[2]{0}', space=sflag, size = 0x8, scoped, tag = 'scoped memory for tpu_custom_call.1']
    #allocation4 [shape = 's32[2]{0}', space=sflag, size = 0x8, scoped, tag = 'scoped memory for tpu_custom_call.1']
    #allocation5 [shape = 'u8[131072]{0}', space=vmem, size = 0x20000, scoped, tag = 'output window, operand 0']
    %7 = vsyncpa [#allocation3], 0
    %s8 = scalar_lea.sflag [#allocation3], 1
    %9 = vsyncpa %s8, 0
    %10 = vsyncpa [#allocation4], 0
    %s11 = scalar_lea.sflag [#allocation4], 1
    %12 = vsyncpa %s11, 0
    loop: start=0, step=1, limit=4
    $region2: #{tpu_custom_call.1} parent=1 // loop_pre_header
      _
    $region3: #{tpu_custom_call.1} parent=1 // loop_header
      %s14 = sphi 0, %s18
      %p15 = scmp.ge.s32.totalorder %s14, 4
      %s24 = sphi 0, %s26
      %s27 = sphi 0, %s24
      %s28 = sphi 0, %s27
      %s44 = sphi 0, %s28
      %s48 = sphi 0, %s48
      %s50 = sphi 0, %s48
      %s51 = sphi 0, %s50
      %s65 = sphi 0, %s51
      %s71 = sphi 0, %s73
      %s74 = sphi 0, %s71
      %s75 = sphi 0, %s74
      %s91 = sphi 0, %s75
    $region4: #{tpu_custom_call.1} parent=1 // loop_header_branch
      %17 = sbr.rel (%p15) target = $region8
    $region5: #{tpu_custom_call.1} parent=1 // loop_body
      %s19 = ssub.s32 %s14, 1
      %s20 = ssub.s32 %s14, 2
      %s21 = sadd.s32 %s14, 1
      %s22 = ssub.s32 %s14, %s21
      %p23 = scmp.eq.s32.totalorder %s22, 0
      %s25 = sadd.s32 %s24, 1
      %s26 = scalar_select %p23, %s24, %s25
      %p29 = pneg %p23
      %p30 = scmp.eq.s32.totalorder %s14, 1
      %p31 = por %p29, %p30
      %p32 = scmp.ne.s32.totalorder %s24, %s27
      %p33 = scmp.eq.s32.totalorder %s14, 0
      %p34 = por %p32, %p33
      %p35 = scmp.ne.s32.totalorder %s24, %s27
      %p36 = scmp.eq.s32.totalorder %s19, 1
      %p37 = por %p35, %p36
      %p38 = scmp.ne.s32.totalorder %s27, %s28
      %p39 = scmp.eq.s32.totalorder %s19, 0
      %p40 = por %p38, %p39
      %p41 = scmp.ne.s32.totalorder %s27, %s28
      %p42 = scmp.eq.s32.totalorder %s20, 1
      %p43 = por %p41, %p42
      %p45 = scmp.ne.s32.totalorder %s28, %s44
      %p46 = scmp.eq.s32.totalorder %s20, 0
      %p47 = por %p45, %p46
      %s49 = sadd.s32 %s48, 1
      %p52 = scmp.eq.s32.totalorder %s14, 1
      %p53 = scmp.ne.s32.totalorder %s48, %s50
      %p54 = scmp.eq.s32.totalorder %s14, 0
      %p55 = por %p53, %p54
      %p56 = scmp.ne.s32.totalorder %s48, %s50
      %p57 = scmp.eq.s32.totalorder %s19, 1
      %p58 = por %p56, %p57
      %p59 = scmp.ne.s32.totalorder %s50, %s51
      %p60 = scmp.eq.s32.totalorder %s19, 0
      %p61 = por %p59, %p60
      %p62 = scmp.ne.s32.totalorder %s50, %s51
      %p63 = scmp.eq.s32.totalorder %s20, 1
      %p64 = por %p62, %p63
      %p66 = scmp.ne.s32.totalorder %s51, %s65
      %p67 = scmp.eq.s32.totalorder %s20, 0
      %p68 = por %p66, %p67
      %s69 = ssub.s32 %s14, %s21
      %p70 = scmp.eq.s32.totalorder %s69, 0
      %s72 = sadd.s32 %s71, 1
      %s73 = scalar_select %p70, %s71, %s72
      %p76 = pneg %p70
      %p77 = scmp.eq.s32.totalorder %s14, 1
      %p78 = por %p76, %p77
      %p79 = scmp.ne.s32.totalorder %s71, %s74
      %p80 = scmp.eq.s32.totalorder %s14, 0
      %p81 = por %p79, %p80
      %p82 = scmp.ne.s32.totalorder %s71, %s74
      %p83 = scmp.eq.s32.totalorder %s19, 1
      %p84 = por %p82, %p83
      %p85 = scmp.ne.s32.totalorder %s74, %s75
      %p86 = scmp.eq.s32.totalorder %s19, 0
      %p87 = por %p85, %p86
      %p88 = scmp.ne.s32.totalorder %s74, %s75
      %p89 = scmp.eq.s32.totalorder %s20, 1
      %p90 = por %p88, %p89
      %p92 = scmp.ne.s32.totalorder %s75, %s91
      %p93 = scmp.eq.s32.totalorder %s20, 0
      %p94 = por %p92, %p93
      %p95 = scmp.le.s32.totalorder 1, %s14
      %p96 = scmp.lt.s32.totalorder %s14, 3
      %p97 = pnand %p95, %p96
      %p98 = pneg %p97
      // Predicated region
      $region9: #{tpu_custom_call.1} parent=5 // pred_check
        _
      $region10: #{tpu_custom_call.1} parent=5 // pred_check_branch
        %100 = sbr.rel (%p97) target = $region12
      $region11: #{tpu_custom_call.1} parent=5 // pred_region
        %s101 = ssub.s32 %s14, 1
        // Predicated region
        $region13: #{tpu_custom_call.1} parent=11 // pred_check
          %p102 = pneg %p61
        $region14: #{tpu_custom_call.1} parent=11 // pred_check_branch
          %104 = sbr.rel (%p102) target = $region16
        $region15: #{tpu_custom_call.1} parent=11 // pred_region
          _
        $region16: #{tpu_custom_call.1} parent=11 // pred_fallthru
          _
      $region12: #{tpu_custom_call.1} parent=5 // pred_fallthru
        _
      %p105 = scmp.lt.s32.totalorder %s14, 2
      // Predicated region
      $region17: #{tpu_custom_call.1} parent=5 // pred_check
        %p106 = pneg %p105
      $region18: #{tpu_custom_call.1} parent=5 // pred_check_branch
        %108 = sbr.rel (%p106) target = $region20
      $region19: #{tpu_custom_call.1} parent=5 // pred_region
        // Predicated region
        $region21: #{tpu_custom_call.1} parent=19 // pred_check
          %p109 = pneg %p34
        $region22: #{tpu_custom_call.1} parent=19 // pred_check_branch
          %111 = sbr.rel (%p109) target = $region24
        $region23: #{tpu_custom_call.1} parent=19 // pred_region
          %s112 = sand.u32 %s24, 1
          %s113 = scalar_lea.sflag [#allocation3], %s112
          %s114 = sand.u32 %s24, 1
          %s115 = smul.addr %s114, 384
          %s116 = scalar_lea.vmem [#allocation2], %s115
          %s117 = smul.u32 2, %s14
          %s119 = ssub.s32 6144, 6144
          %120 = vsyncadd %s113, %s119
          %s121 = smul.addr %s117, 24
          %s122 = smul.addr %s121, 128
          %s123 = scalar_lea.hbm %s0, %s122
          %s124 = sshll.u32 %s116, 4
          %s125 = int_to_ptr.vmem [resolvable:$true] %s124
          %130 = dma.hbm_to_vmem [thread:$0]  %s123, 6144, %s125, %s113, 384, 384, 24
        $region24: #{tpu_custom_call.1} parent=19 // pred_fallthru
          _
      $region20: #{tpu_custom_call.1} parent=5 // pred_fallthru
        _
      %p131 = scmp.le.s32.totalorder 1, %s14
      %p132 = scmp.lt.s32.totalorder %s14, 3
      %p133 = pnand %p131, %p132
      %p134 = pneg %p133
      // Predicated region
      $region25: #{tpu_custom_call.1} parent=5 // pred_check
        _
      $region26: #{tpu_custom_call.1} parent=5 // pred_check_branch
        %136 = sbr.rel (%p133) target = $region28
      $region27: #{tpu_custom_call.1} parent=5 // pred_region
        %s137 = ssub.s32 %s14, 1
        %s138 = sand.u32 %s27, 1
        %s139 = scalar_lea.sflag [#allocation3], %s138
        %s140 = sand.u32 %s27, 1
        %s141 = smul.addr %s140, 384
        %s142 = scalar_lea.vmem [#allocation2], %s141
        // Predicated region
        $region29: #{tpu_custom_call.1} parent=27 // pred_check
          %p143 = pneg %p40
        $region30: #{tpu_custom_call.1} parent=27 // pred_check_branch
          %145 = sbr.rel (%p143) target = $region32
        $region31: #{tpu_custom_call.1} parent=27 // pred_region
          %146 = dma.done %s139, 6144
        $region32: #{tpu_custom_call.1} parent=27 // pred_fallthru
          _
        %s147 = sand.u32 %s27, 1
        %s148 = scalar_lea.sflag [#allocation3], %s147
        %s149 = sand.u32 %s27, 1
        %s150 = smul.addr %s149, 384
        %s151 = scalar_lea.vmem [#allocation2], %s150
        %p152 = pneg %p40
        %p153 = pneg %p37
        %p154 = pneg %p61
        %p155 = pneg %p58
        %p156 = pneg %p87
        %p157 = pneg %p84
        %s158 = sand.u32 %s74, 1
        %s159 = scalar_lea.sflag [#allocation4], %s158
        %s160 = sand.u32 %s74, 1
        %s161 = smul.addr %s160, 128
        %s162 = scalar_lea.vmem [#allocation5], %s161
        %s163 = smul.u32 2, %s19
        %s164 = smul.u32 2, %s19
        %v166 = vld [vmem:[%s142] sm:$0xff]
        %v167 = vld [vmem:[%s142 + $0x8] sm:$0xff]
        %v168 = vld [vmem:[%s142 + $0x10] sm:$0xff]
        %v169 = vld [vmem:[%s142 + $0x18] sm:$0xff]
        %v170 = vld [vmem:[%s142 + $0x20] sm:$0xff]
        %v171 = vld [vmem:[%s142 + $0x28] sm:$0xff]
        %v172 = vld [vmem:[%s142 + $0x30] sm:$0xff]
        %v173 = vld [vmem:[%s142 + $0x38] sm:$0xff]
        %v174 = vld [vmem:[%s142 + $0x40] sm:$0xff]
        %v175 = vld [vmem:[%s142 + $0x48] sm:$0xff]
        %v176 = vld [vmem:[%s142 + $0x50] sm:$0xff]
        %v177 = vld [vmem:[%s142 + $0x58] sm:$0xff]
        %v178 = vld [vmem:[%s142 + $0x60] sm:$0xff]
        %v179 = vld [vmem:[%s142 + $0x68] sm:$0xff]
        %v180 = vld [vmem:[%s142 + $0x70] sm:$0xff]
        %v181 = vld [vmem:[%s142 + $0x78] sm:$0xff]
        %v182 = vld [vmem:[%s142 + $0x80] sm:$0xff]
        %v183 = vld [vmem:[%s142 + $0x88] sm:$0xff]
        %v184 = vld [vmem:[%s142 + $0x90] sm:$0xff]
        %v185 = vld [vmem:[%s142 + $0x98] sm:$0xff]
        %v186 = vld [vmem:[%s142 + $0xa0] sm:$0xff]
        %v187 = vld [vmem:[%s142 + $0xa8] sm:$0xff]
        %v188 = vld [vmem:[%s142 + $0xb0] sm:$0xff]
        %v189 = vld [vmem:[%s142 + $0xb8] sm:$0xff]
        %v190 = vld [vmem:[%s142 + $0xc0] sm:$0xff]
        %v191 = vld [vmem:[%s142 + $0xc8] sm:$0xff]
        %v192 = vld [vmem:[%s142 + $0xd0] sm:$0xff]
        %v193 = vld [vmem:[%s142 + $0xd8] sm:$0xff]
        %v194 = vld [vmem:[%s142 + $0xe0] sm:$0xff]
        %v195 = vld [vmem:[%s142 + $0xe8] sm:$0xff]
        %v196 = vld [vmem:[%s142 + $0xf0] sm:$0xff]
        %v197 = vld [vmem:[%s142 + $0xf8] sm:$0xff]
        %v198 = vld [vmem:[%s142 + $0x100] sm:$0xff]
        %v199 = vld [vmem:[%s142 + $0x108] sm:$0xff]
        %v200 = vld [vmem:[%s142 + $0x110] sm:$0xff]
        %v201 = vld [vmem:[%s142 + $0x118] sm:$0xff]
        %v202 = vld [vmem:[%s142 + $0x120] sm:$0xff]
        %v203 = vld [vmem:[%s142 + $0x128] sm:$0xff]
        %v204 = vld [vmem:[%s142 + $0x130] sm:$0xff]
        %v205 = vld [vmem:[%s142 + $0x138] sm:$0xff]
        %v206 = vld [vmem:[%s142 + $0x140] sm:$0xff]
        %v207 = vld [vmem:[%s142 + $0x148] sm:$0xff]
        %v208 = vld [vmem:[%s142 + $0x150] sm:$0xff]
        %v209 = vld [vmem:[%s142 + $0x158] sm:$0xff]
        %v210 = vld [vmem:[%s142 + $0x160] sm:$0xff]
        %v211 = vld [vmem:[%s142 + $0x168] sm:$0xff]
        %v212 = vld [vmem:[%s142 + $0x170] sm:$0xff]
        %v213 = vld [vmem:[%s142 + $0x178] sm:$0xff]
        %v214 = vpack.c.bf16 %v169, %v166
        %v215 = vpack.c.bf16 %v170, %v167
        %v216 = vpack.c.bf16 %v171, %v168
        %v217 = vpack.c.bf16 %v175, %v172
        %v218 = vpack.c.bf16 %v176, %v173
        %v219 = vpack.c.bf16 %v177, %v174
        %v220 = vpack.c.bf16 %v181, %v178
        %v221 = vpack.c.bf16 %v182, %v179
        %v222 = vpack.c.bf16 %v183, %v180
        %v223 = vpack.c.bf16 %v187, %v184
        %v224 = vpack.c.bf16 %v188, %v185
        %v225 = vpack.c.bf16 %v189, %v186
        %v226 = vpack.c.bf16 %v193, %v190
        %v227 = vpack.c.bf16 %v194, %v191
        %v228 = vpack.c.bf16 %v195, %v192
        %v229 = vpack.c.bf16 %v199, %v196
        %v230 = vpack.c.bf16 %v200, %v197
        %v231 = vpack.c.bf16 %v201, %v198
        %v232 = vpack.c.bf16 %v205, %v202
        %v233 = vpack.c.bf16 %v206, %v203
        %v234 = vpack.c.bf16 %v207, %v204
        %v235 = vpack.c.bf16 %v211, %v208
        %v236 = vpack.c.bf16 %v212, %v209
        %v237 = vpack.c.bf16 %v213, %v210
        %v238 = vld [vmem:[%s1] sm:$0xff]
        %v239 = vld [vmem:[%s1 + $0x8] sm:$0xff]
        %v240 = vld [vmem:[%s1 + $0x10] sm:$0xff]
        %v241 = vld [vmem:[%s1 + $0x18] sm:$0xff]
        %v242 = vld [vmem:[%s1 + $0x20] sm:$0xff]
        %v243 = vld [vmem:[%s1 + $0x28] sm:$0xff]
        %v244 = vld [vmem:[%s1 + $0x30] sm:$0xff]
        %v245 = vld [vmem:[%s1 + $0x38] sm:$0xff]
        %v246 = vld [vmem:[%s1 + $0x40] sm:$0xff]
        %v247 = vld [vmem:[%s1 + $0x48] sm:$0xff]
        %v248 = vld [vmem:[%s1 + $0x50] sm:$0xff]
        %v249 = vld [vmem:[%s1 + $0x58] sm:$0xff]
        %v250 = vld [vmem:[%s1 + $0x60] sm:$0xff]
        %v251 = vld [vmem:[%s1 + $0x68] sm:$0xff]
        %v252 = vld [vmem:[%s1 + $0x70] sm:$0xff]
        %v253 = vld [vmem:[%s1 + $0x78] sm:$0xff]
        %v254 = vld [vmem:[%s1 + $0x80] sm:$0xff]
        %v255 = vld [vmem:[%s1 + $0x88] sm:$0xff]
        %v256 = vld [vmem:[%s1 + $0x90] sm:$0xff]
        %v257 = vld [vmem:[%s1 + $0x98] sm:$0xff]
        %v258 = vld [vmem:[%s1 + $0xa0] sm:$0xff]
        %v259 = vld [vmem:[%s1 + $0xa8] sm:$0xff]
        %v260 = vld [vmem:[%s1 + $0xb0] sm:$0xff]
        %v261 = vld [vmem:[%s1 + $0xb8] sm:$0xff]
        %v262 = vld [vmem:[%s1 + $0xc0] sm:$0xff]
        %v263 = vld [vmem:[%s1 + $0xc8] sm:$0xff]
        %v264 = vld [vmem:[%s1 + $0xd0] sm:$0xff]
        %v265 = vld [vmem:[%s1 + $0xd8] sm:$0xff]
        %v266 = vld [vmem:[%s1 + $0xe0] sm:$0xff]
        %v267 = vld [vmem:[%s1 + $0xe8] sm:$0xff]
        %v268 = vld [vmem:[%s1 + $0xf0] sm:$0xff]
        %v269 = vld [vmem:[%s1 + $0xf8] sm:$0xff]
        %v270 = vld [vmem:[%s1 + $0x100] sm:$0xff]
        %v271 = vld [vmem:[%s1 + $0x108] sm:$0xff]
        %v272 = vld [vmem:[%s1 + $0x110] sm:$0xff]
        %v273 = vld [vmem:[%s1 + $0x118] sm:$0xff]
        %v274 = vld [vmem:[%s1 + $0x120] sm:$0xff]
        %v275 = vld [vmem:[%s1 + $0x128] sm:$0xff]
        %v276 = vld [vmem:[%s1 + $0x130] sm:$0xff]
        %v277 = vld [vmem:[%s1 + $0x138] sm:$0xff]
        %v278 = vld [vmem:[%s1 + $0x140] sm:$0xff]
        %v279 = vld [vmem:[%s1 + $0x148] sm:$0xff]
        %v280 = vld [vmem:[%s1 + $0x150] sm:$0xff]
        %v281 = vld [vmem:[%s1 + $0x158] sm:$0xff]
        %v282 = vld [vmem:[%s1 + $0x160] sm:$0xff]
        %v283 = vld [vmem:[%s1 + $0x168] sm:$0xff]
        %v284 = vld [vmem:[%s1 + $0x170] sm:$0xff]
        %v285 = vld [vmem:[%s1 + $0x178] sm:$0xff]
        %v334 = vunpack.c.l.b16 %v238
        %v335 = vunpack.c.h.b16 %v238
        %v336 = vunpack.c.l.b16 %v239
        %v337 = vunpack.c.h.b16 %v239
        %v338 = vunpack.c.l.b16 %v240
        %v339 = vunpack.c.h.b16 %v240
        %v340 = vunpack.c.l.b16 %v241
        %v341 = vunpack.c.h.b16 %v241
        %v342 = vunpack.c.l.b16 %v242
        %v343 = vunpack.c.h.b16 %v242
        %v344 = vunpack.c.l.b16 %v243
        %v345 = vunpack.c.h.b16 %v243
        %v346 = vunpack.c.l.b16 %v244
        %v347 = vunpack.c.h.b16 %v244
        %v348 = vunpack.c.l.b16 %v245
        %v349 = vunpack.c.h.b16 %v245
        %v350 = vunpack.c.l.b16 %v246
        %v351 = vunpack.c.h.b16 %v246
        %v352 = vunpack.c.l.b16 %v247
        %v353 = vunpack.c.h.b16 %v247
        %v354 = vunpack.c.l.b16 %v248
        %v355 = vunpack.c.h.b16 %v248
        %v356 = vunpack.c.l.b16 %v249
        %v357 = vunpack.c.h.b16 %v249
        %v358 = vunpack.c.l.b16 %v250
        %v359 = vunpack.c.h.b16 %v250
        %v360 = vunpack.c.l.b16 %v251
        %v361 = vunpack.c.h.b16 %v251
        %v362 = vunpack.c.l.b16 %v252
        %v363 = vunpack.c.h.b16 %v252
        %v364 = vunpack.c.l.b16 %v253
        %v365 = vunpack.c.h.b16 %v253
        %v366 = vunpack.c.l.b16 %v254
        %v367 = vunpack.c.h.b16 %v254
        %v368 = vunpack.c.l.b16 %v255
        %v369 = vunpack.c.h.b16 %v255
        %v370 = vunpack.c.l.b16 %v256
        %v371 = vunpack.c.h.b16 %v256
        %v372 = vunpack.c.l.b16 %v257
        %v373 = vunpack.c.h.b16 %v257
        %v374 = vunpack.c.l.b16 %v258
        %v375 = vunpack.c.h.b16 %v258
        %v376 = vunpack.c.l.b16 %v259
        %v377 = vunpack.c.h.b16 %v259
        %v378 = vunpack.c.l.b16 %v260
        %v379 = vunpack.c.h.b16 %v260
        %v380 = vunpack.c.l.b16 %v261
        %v381 = vunpack.c.h.b16 %v261
        %v382 = vunpack.c.l.b16 %v262
        %v383 = vunpack.c.h.b16 %v262
        %v384 = vunpack.c.l.b16 %v263
        %v385 = vunpack.c.h.b16 %v263
        %v386 = vunpack.c.l.b16 %v264
        %v387 = vunpack.c.h.b16 %v264
        %v388 = vunpack.c.l.b16 %v265
        %v389 = vunpack.c.h.b16 %v265
        %v390 = vunpack.c.l.b16 %v266
        %v391 = vunpack.c.h.b16 %v266
        %v392 = vunpack.c.l.b16 %v267
        %v393 = vunpack.c.h.b16 %v267
        %v394 = vunpack.c.l.b16 %v268
        %v395 = vunpack.c.h.b16 %v268
        %v396 = vunpack.c.l.b16 %v269
        %v397 = vunpack.c.h.b16 %v269
        %v398 = vunpack.c.l.b16 %v270
        %v399 = vunpack.c.h.b16 %v270
        %v400 = vunpack.c.l.b16 %v271
        %v401 = vunpack.c.h.b16 %v271
        %v402 = vunpack.c.l.b16 %v272
        %v403 = vunpack.c.h.b16 %v272
        %v404 = vunpack.c.l.b16 %v273
        %v405 = vunpack.c.h.b16 %v273
        %v406 = vunpack.c.l.b16 %v274
        %v407 = vunpack.c.h.b16 %v274
        %v408 = vunpack.c.l.b16 %v275
        %v409 = vunpack.c.h.b16 %v275
        %v410 = vunpack.c.l.b16 %v276
        %v411 = vunpack.c.h.b16 %v276
        %v412 = vunpack.c.l.b16 %v277
        %v413 = vunpack.c.h.b16 %v277
        %v414 = vunpack.c.l.b16 %v278
        %v415 = vunpack.c.h.b16 %v278
        %v416 = vunpack.c.l.b16 %v279
        %v417 = vunpack.c.h.b16 %v279
        %v418 = vunpack.c.l.b16 %v280
        %v419 = vunpack.c.h.b16 %v280
        %v420 = vunpack.c.l.b16 %v281
        %v421 = vunpack.c.h.b16 %v281
        %v422 = vunpack.c.l.b16 %v282
        %v423 = vunpack.c.h.b16 %v282
        %v424 = vunpack.c.l.b16 %v283
        %v425 = vunpack.c.h.b16 %v283
        %v426 = vunpack.c.l.b16 %v284
        %v427 = vunpack.c.h.b16 %v284
        %v428 = vunpack.c.l.b16 %v285
        %v429 = vunpack.c.h.b16 %v285
        %v430 = vpack.c.b16 %v336, %v334
        %v431 = vpack.c.b16 %v337, %v335
        %v432 = vpack.c.b16 %v340, %v338
        %v433 = vpack.c.b16 %v341, %v339
        %v434 = vpack.c.b16 %v344, %v342
        %v435 = vpack.c.b16 %v345, %v343
        %v436 = vpack.c.b16 %v348, %v346
        %v437 = vpack.c.b16 %v349, %v347
        %v438 = vpack.c.b16 %v352, %v350
        %v439 = vpack.c.b16 %v353, %v351
        %v440 = vpack.c.b16 %v356, %v354
        %v441 = vpack.c.b16 %v357, %v355
        %v442 = vpack.c.b16 %v360, %v358
        %v443 = vpack.c.b16 %v361, %v359
        %v444 = vpack.c.b16 %v364, %v362
        %v445 = vpack.c.b16 %v365, %v363
        %v446 = vpack.c.b16 %v368, %v366
        %v447 = vpack.c.b16 %v369, %v367
        %v448 = vpack.c.b16 %v372, %v370
        %v449 = vpack.c.b16 %v373, %v371
        %v450 = vpack.c.b16 %v376, %v374
        %v451 = vpack.c.b16 %v377, %v375
        %v452 = vpack.c.b16 %v380, %v378
        %v453 = vpack.c.b16 %v381, %v379
        %v454 = vpack.c.b16 %v384, %v382
        %v455 = vpack.c.b16 %v385, %v383
        %v456 = vpack.c.b16 %v388, %v386
        %v457 = vpack.c.b16 %v389, %v387
        %v458 = vpack.c.b16 %v392, %v390
        %v459 = vpack.c.b16 %v393, %v391
        %v460 = vpack.c.b16 %v396, %v394
        %v461 = vpack.c.b16 %v397, %v395
        %v462 = vpack.c.b16 %v400, %v398
        %v463 = vpack.c.b16 %v401, %v399
        %v464 = vpack.c.b16 %v404, %v402
        %v465 = vpack.c.b16 %v405, %v403
        %v466 = vpack.c.b16 %v408, %v406
        %v467 = vpack.c.b16 %v409, %v407
        %v468 = vpack.c.b16 %v412, %v410
        %v469 = vpack.c.b16 %v413, %v411
        %v470 = vpack.c.b16 %v416, %v414
        %v471 = vpack.c.b16 %v417, %v415
        %v472 = vpack.c.b16 %v420, %v418
        %v473 = vpack.c.b16 %v421, %v419
        %v474 = vpack.c.b16 %v424, %v422
        %v475 = vpack.c.b16 %v425, %v423
        %v476 = vpack.c.b16 %v428, %v426
        %v477 = vpack.c.b16 %v429, %v427
        %526 = vmatprep.subr.bf16.mxu0 %v431
        %527 = vmatpush1.bf16.msra.mxu0 %v430
        %528 = vmatprep.subr.bf16.mxu0 %v433
        %529 = vmatpush1.bf16.msra.mxu0 %v432
        %530 = vmatprep.subr.bf16.mxu0 %v435
        %531 = vmatpush1.bf16.msra.mxu0 %v434
        %532 = vmatprep.subr.bf16.mxu0 %v437
        %533 = vmatpush1.bf16.msra.mxu0 %v436
        %534 = vmatprep.subr.bf16.mxu0 %v439
        %535 = vmatpush1.bf16.msra.mxu0 %v438
        %536 = vmatprep.subr.bf16.mxu0 %v441
        %537 = vmatpush1.bf16.msra.mxu0 %v440
        %538 = vmatprep.subr.bf16.mxu0 %v443
        %539 = vmatpush1.bf16.msra.mxu0 %v442
        %540 = vmatprep.subr.bf16.mxu0 %v445
        %541 = vmatpush1.bf16.msra.mxu0 %v444
        %542 = vmatprep.subr.bf16.mxu0 %v447
        %543 = vmatpush1.bf16.msra.mxu0 %v446
        %544 = vmatprep.subr.bf16.mxu0 %v449
        %545 = vmatpush1.bf16.msra.mxu0 %v448
        %546 = vmatprep.subr.bf16.mxu0 %v451
        %547 = vmatpush1.bf16.msra.mxu0 %v450
        %548 = vmatprep.subr.bf16.mxu0 %v453
        %549 = vmatpush1.bf16.msra.mxu0 %v452
        %550 = vmatprep.subr.bf16.mxu0 %v455
        %551 = vmatpush1.bf16.msra.mxu0 %v454
        %552 = vmatprep.subr.bf16.mxu0 %v457
        %553 = vmatpush1.bf16.msra.mxu0 %v456
        %554 = vmatprep.subr.bf16.mxu0 %v459
        %555 = vmatpush1.bf16.msra.mxu0 %v458
        %556 = vmatprep.subr.bf16.mxu0 %v461
        %557 = vmatpush1.bf16.msra.mxu0 %v460
        %558 = vmatprep.mubr.bf16.mxu0 %v215
        %559 = vmatmul.mubr.bf16.gmra.mrb[0].mxu0 %v214
        %v560 = vpop.f32.mrb[0].mxu0
        %v561 = vadd.f32 0.0, %v560
        %v562 = vpop.f32.mrb[0].mxu0
        %v563 = vadd.f32 0.0, %v562
        %v564 = vpop.f32.mrb[0].mxu0
        %v565 = vadd.f32 0.0, %v564
        %v566 = vpop.f32.mrb[0].mxu0
        %v567 = vadd.f32 0.0, %v566
        %568 = vmatprep.mubr.bf16.mxu0 %v218
        %569 = vmatmul.mubr.bf16.gmra.mrb[0].mxu0 %v217
        %v570 = vpop.f32.mrb[0].mxu0
        %v571 = vadd.f32 0.0, %v570
        %v572 = vpop.f32.mrb[0].mxu0
        %v573 = vadd.f32 0.0, %v572
        %v574 = vpop.f32.mrb[0].mxu0
        %v575 = vadd.f32 0.0, %v574
        %v576 = vpop.f32.mrb[0].mxu0
        %v577 = vadd.f32 0.0, %v576
        %578 = vmatprep.mubr.bf16.mxu0 %v221
        %579 = vmatmul.mubr.bf16.gmra.mrb[0].mxu0 %v220
        %v580 = vpop.f32.mrb[0].mxu0
        %v581 = vadd.f32 0.0, %v580
        %v582 = vpop.f32.mrb[0].mxu0
        %v583 = vadd.f32 0.0, %v582
        %v584 = vpop.f32.mrb[0].mxu0
        %v585 = vadd.f32 0.0, %v584
        %v586 = vpop.f32.mrb[0].mxu0
        %v587 = vadd.f32 0.0, %v586
        %588 = vmatprep.mubr.bf16.mxu0 %v224
        %589 = vmatmul.mubr.bf16.gmra.mrb[0].mxu0 %v223
        %v590 = vpop.f32.mrb[0].mxu0
        %v591 = vadd.f32 0.0, %v590
        %v592 = vpop.f32.mrb[0].mxu0
        %v593 = vadd.f32 0.0, %v592
        %v594 = vpop.f32.mrb[0].mxu0
        %v595 = vadd.f32 0.0, %v594
        %v596 = vpop.f32.mrb[0].mxu0
        %v597 = vadd.f32 0.0, %v596
        %598 = vmatprep.mubr.bf16.mxu0 %v227
        %599 = vmatmul.mubr.bf16.gmra.mrb[0].mxu0 %v226
        %v600 = vpop.f32.mrb[0].mxu0
        %v601 = vadd.f32 0.0, %v600
        %v602 = vpop.f32.mrb[0].mxu0
        %v603 = vadd.f32 0.0, %v602
        %v604 = vpop.f32.mrb[0].mxu0
        %v605 = vadd.f32 0.0, %v604
        %v606 = vpop.f32.mrb[0].mxu0
        %v607 = vadd.f32 0.0, %v606
        %608 = vmatprep.mubr.bf16.mxu0 %v230
        %609 = vmatmul.mubr.bf16.gmra.mrb[0].mxu0 %v229
        %v610 = vpop.f32.mrb[0].mxu0
        %v611 = vadd.f32 0.0, %v610
        %v612 = vpop.f32.mrb[0].mxu0
        %v613 = vadd.f32 0.0, %v612
        %v614 = vpop.f32.mrb[0].mxu0
        %v615 = vadd.f32 0.0, %v614
        %v616 = vpop.f32.mrb[0].mxu0
        %v617 = vadd.f32 0.0, %v616
        %618 = vmatprep.mubr.bf16.mxu0 %v233
        %619 = vmatmul.mubr.bf16.gmra.mrb[0].mxu0 %v232
        %v620 = vpop.f32.mrb[0].mxu0
        %v621 = vadd.f32 0.0, %v620
        %v622 = vpop.f32.mrb[0].mxu0
        %v623 = vadd.f32 0.0, %v622
        %v624 = vpop.f32.mrb[0].mxu0
        %v625 = vadd.f32 0.0, %v624
        %v626 = vpop.f32.mrb[0].mxu0
        %v627 = vadd.f32 0.0, %v626
        %628 = vmatprep.mubr.bf16.mxu0 %v236
        %629 = vmatmul.mubr.bf16.gmra.mrb[0].mxu0 %v235
        %v630 = vpop.f32.mrb[0].mxu0
        %v631 = vadd.f32 0.0, %v630
        %v632 = vpop.f32.mrb[0].mxu0
        %v633 = vadd.f32 0.0, %v632
        %v634 = vpop.f32.mrb[0].mxu0
        %v635 = vadd.f32 0.0, %v634
        %v636 = vpop.f32.mrb[0].mxu0
        %v637 = vadd.f32 0.0, %v636
        %638 = vdwg.mxu0
        %639 = vmatprep.subr.bf16.mxu0 %v463
        %640 = vmatpush1.bf16.msra.mxu0 %v462
        %641 = vmatprep.subr.bf16.mxu0 %v465
        %642 = vmatpush1.bf16.msra.mxu0 %v464
        %643 = vmatprep.subr.bf16.mxu0 %v467
        %644 = vmatpush1.bf16.msra.mxu0 %v466
        %645 = vmatprep.subr.bf16.mxu0 %v469
        %646 = vmatpush1.bf16.msra.mxu0 %v468
        %647 = vmatprep.subr.bf16.mxu0 %v471
        %648 = vmatpush1.bf16.msra.mxu0 %v470
        %649 = vmatprep.subr.bf16.mxu0 %v473
        %650 = vmatpush1.bf16.msra.mxu0 %v472
        %651 = vmatprep.subr.bf16.mxu0 %v475
        %652 = vmatpush1.bf16.msra.mxu0 %v474
        %653 = vmatprep.subr.bf16.mxu0 %v477
        %654 = vmatpush1.bf16.msra.mxu0 %v476
        %655 = vmatprep.subr.bf16.mxu0 0
        %656 = vmatpush1.bf16.msra.mxu0 0
        %657 = vmatprep.subr.bf16.mxu0 0
        %658 = vmatpush1.bf16.msra.mxu0 0
        %659 = vmatprep.subr.bf16.mxu0 0
        %660 = vmatpush1.bf16.msra.mxu0 0
        %661 = vmatprep.subr.bf16.mxu0 0
        %662 = vmatpush1.bf16.msra.mxu0 0
        %663 = vmatprep.subr.bf16.mxu0 0
        %664 = vmatpush1.bf16.msra.mxu0 0
        %665 = vmatprep.subr.bf16.mxu0 0
        %666 = vmatpush1.bf16.msra.mxu0 0
        %667 = vmatprep.subr.bf16.mxu0 0
        %668 = vmatpush1.bf16.msra.mxu0 0
        %669 = vmatprep.subr.bf16.mxu0 0
        %670 = vmatpush1.bf16.msra.mxu0 0
        %671 = vmatprep.mubr.bf16.mxu0 0
        %672 = vmatmul.mubr.bf16.gmra.mrb[0].mxu0 %v216
        %v673 = vpop.f32.mrb[0].mxu0
        %v674 = vadd.f32 %v561, %v673
        %v675 = vpop.f32.mrb[0].mxu0
        %v676 = vadd.f32 %v563, %v675
        %v677 = vpop.f32.mrb[0].mxu0
        %v678 = vadd.f32 %v565, %v677
        %v679 = vpop.f32.mrb[0].mxu0
        %v680 = vadd.f32 %v567, %v679
        %681 = vmatprep.mubr.bf16.mxu0 0
        %682 = vmatmul.mubr.bf16.gmra.mrb[0].mxu0 %v219
        %v683 = vpop.f32.mrb[0].mxu0
        %v684 = vadd.f32 %v571, %v683
        %v685 = vpop.f32.mrb[0].mxu0
        %v686 = vadd.f32 %v573, %v685
        %v687 = vpop.f32.mrb[0].mxu0
        %v688 = vadd.f32 %v575, %v687
        %v689 = vpop.f32.mrb[0].mxu0
        %v690 = vadd.f32 %v577, %v689
        %691 = vmatprep.mubr.bf16.mxu0 0
        %692 = vmatmul.mubr.bf16.gmra.mrb[0].mxu0 %v222
        %v693 = vpop.f32.mrb[0].mxu0
        %v694 = vadd.f32 %v581, %v693
        %v695 = vpop.f32.mrb[0].mxu0
        %v696 = vadd.f32 %v583, %v695
        %v697 = vpop.f32.mrb[0].mxu0
        %v698 = vadd.f32 %v585, %v697
        %v699 = vpop.f32.mrb[0].mxu0
        %v700 = vadd.f32 %v587, %v699
        %701 = vmatprep.mubr.bf16.mxu0 0
        %702 = vmatmul.mubr.bf16.gmra.mrb[0].mxu0 %v225
        %v703 = vpop.f32.mrb[0].mxu0
        %v704 = vadd.f32 %v591, %v703
        %v705 = vpop.f32.mrb[0].mxu0
        %v706 = vadd.f32 %v593, %v705
        %v707 = vpop.f32.mrb[0].mxu0
        %v708 = vadd.f32 %v595, %v707
        %v709 = vpop.f32.mrb[0].mxu0
        %v710 = vadd.f32 %v597, %v709
        %711 = vmatprep.mubr.bf16.mxu0 0
        %712 = vmatmul.mubr.bf16.gmra.mrb[0].mxu0 %v228
        %v713 = vpop.f32.mrb[0].mxu0
        %v714 = vadd.f32 %v601, %v713
        %v715 = vpop.f32.mrb[0].mxu0
        %v716 = vadd.f32 %v603, %v715
        %v717 = vpop.f32.mrb[0].mxu0
        %v718 = vadd.f32 %v605, %v717
        %v719 = vpop.f32.mrb[0].mxu0
        %v720 = vadd.f32 %v607, %v719
        %721 = vmatprep.mubr.bf16.mxu0 0
        %722 = vmatmul.mubr.bf16.gmra.mrb[0].mxu0 %v231
        %v723 = vpop.f32.mrb[0].mxu0
        %v724 = vadd.f32 %v611, %v723
        %v725 = vpop.f32.mrb[0].mxu0
        %v726 = vadd.f32 %v613, %v725
        %v727 = vpop.f32.mrb[0].mxu0
        %v728 = vadd.f32 %v615, %v727
        %v729 = vpop.f32.mrb[0].mxu0
        %v730 = vadd.f32 %v617, %v729
        %731 = vmatprep.mubr.bf16.mxu0 0
        %732 = vmatmul.mubr.bf16.gmra.mrb[0].mxu0 %v234
        %v733 = vpop.f32.mrb[0].mxu0
        %v734 = vadd.f32 %v621, %v733
        %v735 = vpop.f32.mrb[0].mxu0
        %v736 = vadd.f32 %v623, %v735
        %v737 = vpop.f32.mrb[0].mxu0
        %v738 = vadd.f32 %v625, %v737
        %v739 = vpop.f32.mrb[0].mxu0
        %v740 = vadd.f32 %v627, %v739
        %741 = vmatprep.mubr.bf16.mxu0 0
        %742 = vmatmul.mubr.bf16.gmra.mrb[0].mxu0 %v237
        %v743 = vpop.f32.mrb[0].mxu0
        %v744 = vadd.f32 %v631, %v743
        %v745 = vpop.f32.mrb[0].mxu0
        %v746 = vadd.f32 %v633, %v745
        %v747 = vpop.f32.mrb[0].mxu0
        %v748 = vadd.f32 %v635, %v747
        %v749 = vpop.f32.mrb[0].mxu0
        %v750 = vadd.f32 %v637, %v749
        %751 = vdwg.mxu0
        %v752 = vpack.c.bf16 %v678, %v674
        %v753 = vpack.c.bf16 %v680, %v676
        %v754 = vpack.c.bf16 %v688, %v684
        %v755 = vpack.c.bf16 %v690, %v686
        %v756 = vpack.c.bf16 %v698, %v694
        %v757 = vpack.c.bf16 %v700, %v696
        %v758 = vpack.c.bf16 %v708, %v704
        %v759 = vpack.c.bf16 %v710, %v706
        %v760 = vpack.c.bf16 %v718, %v714
        %v761 = vpack.c.bf16 %v720, %v716
        %v762 = vpack.c.bf16 %v728, %v724
        %v763 = vpack.c.bf16 %v730, %v726
        %v764 = vpack.c.bf16 %v738, %v734
        %v765 = vpack.c.bf16 %v740, %v736
        %v766 = vpack.c.bf16 %v748, %v744
        %v767 = vpack.c.bf16 %v750, %v746
        %772 = vrot.lane.b32.xlu0 %v752, 64
        %v773 = vpop.permute.xlu0 %772
        %774 = vrot.lane.b32.xlu0 %v754, 64
        %v775 = vpop.permute.xlu0 %774
        %776 = vrot.lane.b32.xlu0 %v756, 64
        %v777 = vpop.permute.xlu0 %776
        %778 = vrot.lane.b32.xlu0 %v758, 64
        %v779 = vpop.permute.xlu0 %778
        %vm780 = vcmask 523264
        %v782 = vsel %vm780, %v773, 0
        %v785 = vsel %vm780, %v775, 0
        %v788 = vsel %vm780, %v777, 0
        %v791 = vsel %vm780, %v779, 0
        %v794 = vsel %vm780, %v752, 0
        %v797 = vsel %vm780, %v754, 0
        %v800 = vsel %vm780, %v756, 0
        %v803 = vsel %vm780, %v758, 0
        %805 = vmatprep.subr.bf16.mxu0 0
        %806 = vmatpush1.bf16.xpose.msra.mxu0 %v794
        %807 = vmatprep.subr.bf16.mxu0 0
        %808 = vmatpush1.bf16.xpose.msra.mxu0 %v797
        %809 = vmatprep.subr.bf16.mxu0 0
        %810 = vmatpush1.bf16.xpose.msra.mxu0 %v800
        %811 = vmatprep.subr.bf16.mxu0 0
        %812 = vmatpush1.bf16.xpose.msra.mxu0 %v803
        %813 = vmatprep.subr.bf16.mxu0 0
        %814 = vmatpush1.bf16.xpose.msra.mxu0 0
        %815 = vmatprep.subr.bf16.mxu0 0
        %816 = vmatpush1.bf16.xpose.msra.mxu0 0
        %817 = vmatprep.subr.bf16.mxu0 0
        %818 = vmatpush1.bf16.xpose.msra.mxu0 0
        %819 = vmatprep.subr.bf16.mxu0 0
        %820 = vmatpush1.bf16.xpose.msra.mxu0 0
        %821 = vmatprep.subr.bf16.mxu0 0
        %822 = vmatpush1.bf16.xpose.msra.mxu0 0
        %823 = vmatprep.subr.bf16.mxu0 0
        %824 = vmatpush1.bf16.xpose.msra.mxu0 0
        %825 = vmatprep.subr.bf16.mxu0 0
        %826 = vmatpush1.bf16.xpose.msra.mxu0 0
        %827 = vmatprep.subr.bf16.mxu0 0
        %828 = vmatpush1.bf16.xpose.msra.mxu0 0
        %829 = vmatprep.subr.bf16.mxu0 0
        %830 = vmatpush1.bf16.xpose.msra.mxu0 0
        %831 = vmatprep.subr.bf16.mxu0 0
        %832 = vmatpush1.bf16.xpose.msra.mxu0 0
        %833 = vmatprep.subr.bf16.mxu0 0
        %834 = vmatpush1.bf16.xpose.msra.mxu0 0
        %835 = vmatprep.subr.bf16.mxu0 0
        %836 = vmatpush1.bf16.xpose.msra.mxu0 0
        %837 = vmatprep.mubr.bf16.mxu0 0
        %838 = vmatmul.mubr.bf16.gmra.mrb[0].mxu0 %v782
        %v839 = vpop.f32.mrb[0].mxu0
        %v840 = vadd.f32 0.0, %v839
        %v841 = vpop.f32.mrb[0].mxu0
        %v842 = vpop.f32.mrb[0].mxu0
        %v843 = vadd.f32 0.0, %v842
        %v844 = vpop.f32.mrb[0].mxu0
        %845 = vmatprep.mubr.bf16.mxu0 0
        %846 = vmatmul.mubr.bf16.gmra.mrb[0].mxu0 %v785
        %v847 = vpop.f32.mrb[0].mxu0
        %v848 = vadd.f32 0.0, %v847
        %v849 = vpop.f32.mrb[0].mxu0
        %v850 = vpop.f32.mrb[0].mxu0
        %v851 = vadd.f32 0.0, %v850
        %v852 = vpop.f32.mrb[0].mxu0
        %853 = vmatprep.mubr.bf16.mxu0 0
        %854 = vmatmul.mubr.bf16.gmra.mrb[0].mxu0 %v788
        %v855 = vpop.f32.mrb[0].mxu0
        %v856 = vadd.f32 0.0, %v855
        %v857 = vpop.f32.mrb[0].mxu0
        %v858 = vpop.f32.mrb[0].mxu0
        %v859 = vadd.f32 0.0, %v858
        %v860 = vpop.f32.mrb[0].mxu0
        %861 = vmatprep.mubr.bf16.mxu0 0
        %862 = vmatmul.mubr.bf16.gmra.mrb[0].mxu0 %v791
        %v863 = vpop.f32.mrb[0].mxu0
        %v864 = vadd.f32 0.0, %v863
        %v865 = vpop.f32.mrb[0].mxu0
        %v866 = vpop.f32.mrb[0].mxu0
        %v867 = vadd.f32 0.0, %v866
        %v868 = vpop.f32.mrb[0].mxu0
        %869 = vdwg.mxu0
        %874 = vrot.lane.b32.xlu0 %v760, 64
        %v875 = vpop.permute.xlu0 %874
        %876 = vrot.lane.b32.xlu0 %v762, 64
        %v877 = vpop.permute.xlu0 %876
        %878 = vrot.lane.b32.xlu0 %v764, 64
        %v879 = vpop.permute.xlu0 %878
        %880 = vrot.lane.b32.xlu0 %v766, 64
        %v881 = vpop.permute.xlu0 %880
        %v883 = vsel %vm780, %v875, 0
        %v886 = vsel %vm780, %v877, 0
        %v889 = vsel %vm780, %v879, 0
        %v892 = vsel %vm780, %v881, 0
        %v895 = vsel %vm780, %v760, 0
        %v898 = vsel %vm780, %v762, 0
        %v901 = vsel %vm780, %v764, 0
        %v904 = vsel %vm780, %v766, 0
        %906 = vmatprep.subr.bf16.mxu0 0
        %907 = vmatpush1.bf16.xpose.msra.mxu0 %v895
        %908 = vmatprep.subr.bf16.mxu0 0
        %909 = vmatpush1.bf16.xpose.msra.mxu0 %v898
        %910 = vmatprep.subr.bf16.mxu0 0
        %911 = vmatpush1.bf16.xpose.msra.mxu0 %v901
        %912 = vmatprep.subr.bf16.mxu0 0
        %913 = vmatpush1.bf16.xpose.msra.mxu0 %v904
        %914 = vmatprep.subr.bf16.mxu0 0
        %915 = vmatpush1.bf16.xpose.msra.mxu0 0
        %916 = vmatprep.subr.bf16.mxu0 0
        %917 = vmatpush1.bf16.xpose.msra.mxu0 0
        %918 = vmatprep.subr.bf16.mxu0 0
        %919 = vmatpush1.bf16.xpose.msra.mxu0 0
        %920 = vmatprep.subr.bf16.mxu0 0
        %921 = vmatpush1.bf16.xpose.msra.mxu0 0
        %922 = vmatprep.subr.bf16.mxu0 0
        %923 = vmatpush1.bf16.xpose.msra.mxu0 0
        %924 = vmatprep.subr.bf16.mxu0 0
        %925 = vmatpush1.bf16.xpose.msra.mxu0 0
        %926 = vmatprep.subr.bf16.mxu0 0
        %927 = vmatpush1.bf16.xpose.msra.mxu0 0
        %928 = vmatprep.subr.bf16.mxu0 0
        %929 = vmatpush1.bf16.xpose.msra.mxu0 0
        %930 = vmatprep.subr.bf16.mxu0 0
        %931 = vmatpush1.bf16.xpose.msra.mxu0 0
        %932 = vmatprep.subr.bf16.mxu0 0
        %933 = vmatpush1.bf16.xpose.msra.mxu0 0
        %934 = vmatprep.subr.bf16.mxu0 0
        %935 = vmatpush1.bf16.xpose.msra.mxu0 0
        %936 = vmatprep.subr.bf16.mxu0 0
        %937 = vmatpush1.bf16.xpose.msra.mxu0 0
        %938 = vmatprep.mubr.bf16.mxu0 0
        %939 = vmatmul.mubr.bf16.gmra.mrb[0].mxu0 %v883
        %v940 = vpop.f32.mrb[0].mxu0
        %v941 = vadd.f32 0.0, %v940
        %v942 = vpop.f32.mrb[0].mxu0
        %v943 = vpop.f32.mrb[0].mxu0
        %v944 = vadd.f32 0.0, %v943
        %v945 = vpop.f32.mrb[0].mxu0
        %946 = vmatprep.mubr.bf16.mxu0 0
        %947 = vmatmul.mubr.bf16.gmra.mrb[0].mxu0 %v886
        %v948 = vpop.f32.mrb[0].mxu0
        %v949 = vadd.f32 0.0, %v948
        %v950 = vpop.f32.mrb[0].mxu0
        %v951 = vpop.f32.mrb[0].mxu0
        %v952 = vadd.f32 0.0, %v951
        %v953 = vpop.f32.mrb[0].mxu0
        %954 = vmatprep.mubr.bf16.mxu0 0
        %955 = vmatmul.mubr.bf16.gmra.mrb[0].mxu0 %v889
        %v956 = vpop.f32.mrb[0].mxu0
        %v957 = vadd.f32 0.0, %v956
        %v958 = vpop.f32.mrb[0].mxu0
        %v959 = vpop.f32.mrb[0].mxu0
        %v960 = vadd.f32 0.0, %v959
        %v961 = vpop.f32.mrb[0].mxu0
        %962 = vmatprep.mubr.bf16.mxu0 0
        %963 = vmatmul.mubr.bf16.gmra.mrb[0].mxu0 %v892
        %v964 = vpop.f32.mrb[0].mxu0
        %v965 = vadd.f32 0.0, %v964
        %v966 = vpop.f32.mrb[0].mxu0
        %v967 = vpop.f32.mrb[0].mxu0
        %v968 = vadd.f32 0.0, %v967
        %v969 = vpop.f32.mrb[0].mxu0
        %970 = vdwg.mxu0
        %v971 = vlaneseq
        %v972 = vshrl.u32 %v971, 7
        %v973 = vadd.s32 %v972, 8
        %v974 = vadd.s32 %v972, 16
        %v975 = vadd.s32 %v972, 24
        %v976 = vadd.s32 %v972, 32
        %v977 = vadd.s32 %v972, 40
        %v978 = vadd.s32 %v972, 48
        %v979 = vadd.s32 %v972, 56
        %v980 = vlaneseq
        %v981 = vand.u32 %v980, 127
        %vm982 = vcmp.le.s32.totalorder %v981, %v972
        %vm983 = vcmp.le.s32.totalorder %v981, %v973
        %vm984 = vcmp.le.s32.totalorder %v981, %v974
        %vm985 = vcmp.le.s32.totalorder %v981, %v975
        %vm986 = vcmp.le.s32.totalorder %v981, %v976
        %vm987 = vcmp.le.s32.totalorder %v981, %v977
        %vm988 = vcmp.le.s32.totalorder %v981, %v978
        %vm989 = vcmp.le.s32.totalorder %v981, %v979
        %v990 = vsel %vm982, 1, 0
        %v991 = vsel %vm983, 1, 0
        %v992 = vsel %vm984, 1, 0
        %v993 = vsel %vm985, 1, 0
        %v994 = vsel %vm986, 1, 0
        %v995 = vsel %vm987, 1, 0
        %v996 = vsel %vm988, 1, 0
        %v997 = vsel %vm989, 1, 0
        %vm998 = vcmp.eq.s32.totalorder %v990, 1
        %vm999 = vcmp.eq.s32.totalorder %v991, 1
        %vm1000 = vcmp.eq.s32.totalorder %v992, 1
        %vm1001 = vcmp.eq.s32.totalorder %v993, 1
        %vm1002 = vcmp.eq.s32.totalorder %v994, 1
        %vm1003 = vcmp.eq.s32.totalorder %v995, 1
        %vm1004 = vcmp.eq.s32.totalorder %v996, 1
        %vm1005 = vcmp.eq.s32.totalorder %v997, 1
        %v1006 = vsel %vm998, %v840, -inf
        %v1007 = vsel %vm999, %v843, -inf
        %v1008 = vsel %vm1000, %v848, -inf
        %v1009 = vsel %vm1001, %v851, -inf
        %v1010 = vsel %vm1002, %v856, -inf
        %v1011 = vsel %vm1003, %v859, -inf
        %v1012 = vsel %vm1004, %v864, -inf
        %v1013 = vsel %vm1005, %v867, -inf
        %v1014 = vsel %vm998, %v941, -inf
        %v1015 = vsel %vm999, %v944, -inf
        %v1016 = vsel %vm1000, %v949, -inf
        %v1017 = vsel %vm1001, %v952, -inf
        %v1018 = vsel %vm1002, %v957, -inf
        %v1019 = vsel %vm1003, %v960, -inf
        %v1020 = vsel %vm1004, %v965, -inf
        %v1021 = vsel %vm1005, %v968, -inf
        %v1022 = vsel %vm780, %v1006, -inf
        %1023 = vmax.xlane.f32.xlu0 %v1022
        %v1024 = vpop.xlane.xlu0 %1023
        %v1025 = vsel %vm780, %v1007, -inf
        %1026 = vmax.xlane.f32.xlu0 %v1025
        %v1027 = vpop.xlane.xlu0 %1026
        %v1028 = vsel %vm780, %v1008, -inf
        %1029 = vmax.xlane.f32.xlu0 %v1028
        %v1030 = vpop.xlane.xlu0 %1029
        %v1031 = vsel %vm780, %v1009, -inf
        %1032 = vmax.xlane.f32.xlu0 %v1031
        %v1033 = vpop.xlane.xlu0 %1032
        %v1034 = vsel %vm780, %v1010, -inf
        %1035 = vmax.xlane.f32.xlu0 %v1034
        %v1036 = vpop.xlane.xlu0 %1035
        %v1037 = vsel %vm780, %v1011, -inf
        %1038 = vmax.xlane.f32.xlu0 %v1037
        %v1039 = vpop.xlane.xlu0 %1038
        %v1040 = vsel %vm780, %v1012, -inf
        %1041 = vmax.xlane.f32.xlu0 %v1040
        %v1042 = vpop.xlane.xlu0 %1041
        %v1043 = vsel %vm780, %v1013, -inf
        %1044 = vmax.xlane.f32.xlu0 %v1043
        %v1045 = vpop.xlane.xlu0 %1044
        %v1046 = vsel %vm780, %v1014, -inf
        %1047 = vmax.xlane.f32.xlu0 %v1046
        %v1048 = vpop.xlane.xlu0 %1047
        %v1049 = vsel %vm780, %v1015, -inf
        %1050 = vmax.xlane.f32.xlu0 %v1049
        %v1051 = vpop.xlane.xlu0 %1050
        %v1052 = vsel %vm780, %v1016, -inf
        %1053 = vmax.xlane.f32.xlu0 %v1052
        %v1054 = vpop.xlane.xlu0 %1053
        %v1055 = vsel %vm780, %v1017, -inf
        %1056 = vmax.xlane.f32.xlu0 %v1055
        %v1057 = vpop.xlane.xlu0 %1056
        %v1058 = vsel %vm780, %v1018, -inf
        %1059 = vmax.xlane.f32.xlu0 %v1058
        %v1060 = vpop.xlane.xlu0 %1059
        %v1061 = vsel %vm780, %v1019, -inf
        %1062 = vmax.xlane.f32.xlu0 %v1061
        %v1063 = vpop.xlane.xlu0 %1062
        %v1064 = vsel %vm780, %v1020, -inf
        %1065 = vmax.xlane.f32.xlu0 %v1064
        %v1066 = vpop.xlane.xlu0 %1065
        %v1067 = vsel %vm780, %v1021, -inf
        %1068 = vmax.xlane.f32.xlu0 %v1067
        %v1069 = vpop.xlane.xlu0 %1068
        %v1070 = vsub.f32 %v1006, %v1024
        %v1071 = vsub.f32 %v1007, %v1027
        %v1072 = vsub.f32 %v1008, %v1030
        %v1073 = vsub.f32 %v1009, %v1033
        %v1074 = vsub.f32 %v1010, %v1036
        %v1075 = vsub.f32 %v1011, %v1039
        %v1076 = vsub.f32 %v1012, %v1042
        %v1077 = vsub.f32 %v1013, %v1045
        %v1078 = vsub.f32 %v1014, %v1048
        %v1079 = vsub.f32 %v1015, %v1051
        %v1080 = vsub.f32 %v1016, %v1054
        %v1081 = vsub.f32 %v1017, %v1057
        %v1082 = vsub.f32 %v1018, %v1060
        %v1083 = vsub.f32 %v1019, %v1063
        %v1084 = vsub.f32 %v1020, %v1066
        %v1085 = vsub.f32 %v1021, %v1069
        %v1086 = vmul.f32 %v1070, 1.442695
        %v1087 = vpow.pop %v1086
        %v1088 = vmul.f32 %v1071, 1.442695
        %v1089 = vpow.pop %v1088
        %v1090 = vmul.f32 %v1072, 1.442695
        %v1091 = vpow.pop %v1090
        %v1092 = vmul.f32 %v1073, 1.442695
        %v1093 = vpow.pop %v1092
        %v1094 = vmul.f32 %v1074, 1.442695
        %v1095 = vpow.pop %v1094
        %v1096 = vmul.f32 %v1075, 1.442695
        %v1097 = vpow.pop %v1096
        %v1098 = vmul.f32 %v1076, 1.442695
        %v1099 = vpow.pop %v1098
        %v1100 = vmul.f32 %v1077, 1.442695
        %v1101 = vpow.pop %v1100
        %v1102 = vmul.f32 %v1078, 1.442695
        %v1103 = vpow.pop %v1102
        %v1104 = vmul.f32 %v1079, 1.442695
        %v1105 = vpow.pop %v1104
        %v1106 = vmul.f32 %v1080, 1.442695
        %v1107 = vpow.pop %v1106
        %v1108 = vmul.f32 %v1081, 1.442695
        %v1109 = vpow.pop %v1108
        %v1110 = vmul.f32 %v1082, 1.442695
        %v1111 = vpow.pop %v1110
        %v1112 = vmul.f32 %v1083, 1.442695
        %v1113 = vpow.pop %v1112
        %v1114 = vmul.f32 %v1084, 1.442695
        %v1115 = vpow.pop %v1114
        %v1116 = vmul.f32 %v1085, 1.442695
        %v1117 = vpow.pop %v1116
        %v1118 = vsel %vm780, %v1087, 0.0
        %1119 = vadd.xlane.f32.xlu0 %v1118
        %v1120 = vpop.xlane.xlu0 %1119
        %v1121 = vsel %vm780, %v1089, 0.0
        %1122 = vadd.xlane.f32.xlu0 %v1121
        %v1123 = vpop.xlane.xlu0 %1122
        %v1124 = vsel %vm780, %v1091, 0.0
        %1125 = vadd.xlane.f32.xlu0 %v1124
        %v1126 = vpop.xlane.xlu0 %1125
        %v1127 = vsel %vm780, %v1093, 0.0
        %1128 = vadd.xlane.f32.xlu0 %v1127
        %v1129 = vpop.xlane.xlu0 %1128
        %v1130 = vsel %vm780, %v1095, 0.0
        %1131 = vadd.xlane.f32.xlu0 %v1130
        %v1132 = vpop.xlane.xlu0 %1131
        %v1133 = vsel %vm780, %v1097, 0.0
        %1134 = vadd.xlane.f32.xlu0 %v1133
        %v1135 = vpop.xlane.xlu0 %1134
        %v1136 = vsel %vm780, %v1099, 0.0
        %1137 = vadd.xlane.f32.xlu0 %v1136
        %v1138 = vpop.xlane.xlu0 %1137
        %v1139 = vsel %vm780, %v1101, 0.0
        %1140 = vadd.xlane.f32.xlu0 %v1139
        %v1141 = vpop.xlane.xlu0 %1140
        %v1142 = vsel %vm780, %v1103, 0.0
        %1143 = vadd.xlane.f32.xlu0 %v1142
        %v1144 = vpop.xlane.xlu0 %1143
        %v1145 = vsel %vm780, %v1105, 0.0
        %1146 = vadd.xlane.f32.xlu0 %v1145
        %v1147 = vpop.xlane.xlu0 %1146
        %v1148 = vsel %vm780, %v1107, 0.0
        %1149 = vadd.xlane.f32.xlu0 %v1148
        %v1150 = vpop.xlane.xlu0 %1149
        %v1151 = vsel %vm780, %v1109, 0.0
        %1152 = vadd.xlane.f32.xlu0 %v1151
        %v1153 = vpop.xlane.xlu0 %1152
        %v1154 = vsel %vm780, %v1111, 0.0
        %1155 = vadd.xlane.f32.xlu0 %v1154
        %v1156 = vpop.xlane.xlu0 %1155
        %v1157 = vsel %vm780, %v1113, 0.0
        %1158 = vadd.xlane.f32.xlu0 %v1157
        %v1159 = vpop.xlane.xlu0 %1158
        %v1160 = vsel %vm780, %v1115, 0.0
        %1161 = vadd.xlane.f32.xlu0 %v1160
        %v1162 = vpop.xlane.xlu0 %1161
        %v1163 = vsel %vm780, %v1117, 0.0
        %1164 = vadd.xlane.f32.xlu0 %v1163
        %v1165 = vpop.xlane.xlu0 %1164
        %v1166 = vpack.c.bf16 %v1089, %v1087
        %v1167 = vpack.c.bf16 %v1093, %v1091
        %v1168 = vpack.c.bf16 %v1097, %v1095
        %v1169 = vpack.c.bf16 %v1101, %v1099
        %v1170 = vpack.c.bf16 %v1105, %v1103
        %v1171 = vpack.c.bf16 %v1109, %v1107
        %v1172 = vpack.c.bf16 %v1113, %v1111
        %v1173 = vpack.c.bf16 %v1117, %v1115
        %v1175 = vsel %vm780, %v1166, 0
        %v1178 = vsel %vm780, %v1167, 0
        %v1181 = vsel %vm780, %v1168, 0
        %v1184 = vsel %vm780, %v1169, 0
        %1186 = vmatprep.subr.bf16.mxu0 0
        %1187 = vmatpush1.bf16.msra.mxu0 %v753
        %1188 = vmatprep.subr.bf16.mxu0 0
        %1189 = vmatpush1.bf16.msra.mxu0 %v755
        %1190 = vmatprep.subr.bf16.mxu0 0
        %1191 = vmatpush1.bf16.msra.mxu0 %v757
        %1192 = vmatprep.subr.bf16.mxu0 0
        %1193 = vmatpush1.bf16.msra.mxu0 %v759
        %1194 = vmatprep.subr.bf16.mxu0 0
        %1195 = vmatpush1.bf16.msra.mxu0 0
        %1196 = vmatprep.subr.bf16.mxu0 0
        %1197 = vmatpush1.bf16.msra.mxu0 0
        %1198 = vmatprep.subr.bf16.mxu0 0
        %1199 = vmatpush1.bf16.msra.mxu0 0
        %1200 = vmatprep.subr.bf16.mxu0 0
        %1201 = vmatpush1.bf16.msra.mxu0 0
        %1202 = vmatprep.subr.bf16.mxu0 0
        %1203 = vmatpush1.bf16.msra.mxu0 0
        %1204 = vmatprep.subr.bf16.mxu0 0
        %1205 = vmatpush1.bf16.msra.mxu0 0
        %1206 = vmatprep.subr.bf16.mxu0 0
        %1207 = vmatpush1.bf16.msra.mxu0 0
        %1208 = vmatprep.subr.bf16.mxu0 0
        %1209 = vmatpush1.bf16.msra.mxu0 0
        %1210 = vmatprep.subr.bf16.mxu0 0
        %1211 = vmatpush1.bf16.msra.mxu0 0
        %1212 = vmatprep.subr.bf16.mxu0 0
        %1213 = vmatpush1.bf16.msra.mxu0 0
        %1214 = vmatprep.subr.bf16.mxu0 0
        %1215 = vmatpush1.bf16.msra.mxu0 0
        %1216 = vmatprep.subr.bf16.mxu0 0
        %1217 = vmatpush1.bf16.msra.mxu0 0
        %1218 = vmatprep.mubr.bf16.mxu0 0
        %1219 = vmatmul.mubr.bf16.gmra.mrb[0].mxu0 %v1175
        %v1220 = vpop.f32.mrb[0].mxu0
        %v1221 = vadd.f32 0.0, %v1220
        %v1222 = vpop.f32.mrb[0].mxu0
        %v1223 = vpop.f32.mrb[0].mxu0
        %v1224 = vadd.f32 0.0, %v1223
        %v1225 = vpop.f32.mrb[0].mxu0
        %1226 = vmatprep.mubr.bf16.mxu0 0
        %1227 = vmatmul.mubr.bf16.gmra.mrb[0].mxu0 %v1178
        %v1228 = vpop.f32.mrb[0].mxu0
        %v1229 = vadd.f32 0.0, %v1228
        %v1230 = vpop.f32.mrb[0].mxu0
        %v1231 = vpop.f32.mrb[0].mxu0
        %v1232 = vadd.f32 0.0, %v1231
        %v1233 = vpop.f32.mrb[0].mxu0
        %1234 = vmatprep.mubr.bf16.mxu0 0
        %1235 = vmatmul.mubr.bf16.gmra.mrb[0].mxu0 %v1181
        %v1236 = vpop.f32.mrb[0].mxu0
        %v1237 = vadd.f32 0.0, %v1236
        %v1238 = vpop.f32.mrb[0].mxu0
        %v1239 = vpop.f32.mrb[0].mxu0
        %v1240 = vadd.f32 0.0, %v1239
        %v1241 = vpop.f32.mrb[0].mxu0
        %1242 = vmatprep.mubr.bf16.mxu0 0
        %1243 = vmatmul.mubr.bf16.gmra.mrb[0].mxu0 %v1184
        %v1244 = vpop.f32.mrb[0].mxu0
        %v1245 = vadd.f32 0.0, %v1244
        %v1246 = vpop.f32.mrb[0].mxu0
        %v1247 = vpop.f32.mrb[0].mxu0
        %v1248 = vadd.f32 0.0, %v1247
        %v1249 = vpop.f32.mrb[0].mxu0
        %1250 = vdwg.mxu0
        %v1252 = vsel %vm780, %v1170, 0
        %v1255 = vsel %vm780, %v1171, 0
        %v1258 = vsel %vm780, %v1172, 0
        %v1261 = vsel %vm780, %v1173, 0
        %1263 = vmatprep.subr.bf16.mxu0 0
        %1264 = vmatpush1.bf16.msra.mxu0 %v761
        %1265 = vmatprep.subr.bf16.mxu0 0
        %1266 = vmatpush1.bf16.msra.mxu0 %v763
        %1267 = vmatprep.subr.bf16.mxu0 0
        %1268 = vmatpush1.bf16.msra.mxu0 %v765
        %1269 = vmatprep.subr.bf16.mxu0 0
        %1270 = vmatpush1.bf16.msra.mxu0 %v767
        %1271 = vmatprep.subr.bf16.mxu0 0
        %1272 = vmatpush1.bf16.msra.mxu0 0
        %1273 = vmatprep.subr.bf16.mxu0 0
        %1274 = vmatpush1.bf16.msra.mxu0 0
        %1275 = vmatprep.subr.bf16.mxu0 0
        %1276 = vmatpush1.bf16.msra.mxu0 0
        %1277 = vmatprep.subr.bf16.mxu0 0
        %1278 = vmatpush1.bf16.msra.mxu0 0
        %1279 = vmatprep.subr.bf16.mxu0 0
        %1280 = vmatpush1.bf16.msra.mxu0 0
        %1281 = vmatprep.subr.bf16.mxu0 0
        %1282 = vmatpush1.bf16.msra.mxu0 0
        %1283 = vmatprep.subr.bf16.mxu0 0
        %1284 = vmatpush1.bf16.msra.mxu0 0
        %1285 = vmatprep.subr.bf16.mxu0 0
        %1286 = vmatpush1.bf16.msra.mxu0 0
        %1287 = vmatprep.subr.bf16.mxu0 0
        %1288 = vmatpush1.bf16.msra.mxu0 0
        %1289 = vmatprep.subr.bf16.mxu0 0
        %1290 = vmatpush1.bf16.msra.mxu0 0
        %1291 = vmatprep.subr.bf16.mxu0 0
        %1292 = vmatpush1.bf16.msra.mxu0 0
        %1293 = vmatprep.subr.bf16.mxu0 0
        %1294 = vmatpush1.bf16.msra.mxu0 0
        %1295 = vmatprep.mubr.bf16.mxu0 0
        %1296 = vmatmul.mubr.bf16.gmra.mrb[0].mxu0 %v1252
        %v1297 = vpop.f32.mrb[0].mxu0
        %v1298 = vadd.f32 0.0, %v1297
        %v1299 = vpop.f32.mrb[0].mxu0
        %v1300 = vpop.f32.mrb[0].mxu0
        %v1301 = vadd.f32 0.0, %v1300
        %v1302 = vpop.f32.mrb[0].mxu0
        %1303 = vmatprep.mubr.bf16.mxu0 0
        %1304 = vmatmul.mubr.bf16.gmra.mrb[0].mxu0 %v1255
        %v1305 = vpop.f32.mrb[0].mxu0
        %v1306 = vadd.f32 0.0, %v1305
        %v1307 = vpop.f32.mrb[0].mxu0
        %v1308 = vpop.f32.mrb[0].mxu0
        %v1309 = vadd.f32 0.0, %v1308
        %v1310 = vpop.f32.mrb[0].mxu0
        %1311 = vmatprep.mubr.bf16.mxu0 0
        %1312 = vmatmul.mubr.bf16.gmra.mrb[0].mxu0 %v1258
        %v1313 = vpop.f32.mrb[0].mxu0
        %v1314 = vadd.f32 0.0, %v1313
        %v1315 = vpop.f32.mrb[0].mxu0
        %v1316 = vpop.f32.mrb[0].mxu0
        %v1317 = vadd.f32 0.0, %v1316
        %v1318 = vpop.f32.mrb[0].mxu0
        %1319 = vmatprep.mubr.bf16.mxu0 0
        %1320 = vmatmul.mubr.bf16.gmra.mrb[0].mxu0 %v1261
        %v1321 = vpop.f32.mrb[0].mxu0
        %v1322 = vadd.f32 0.0, %v1321
        %v1323 = vpop.f32.mrb[0].mxu0
        %v1324 = vpop.f32.mrb[0].mxu0
        %v1325 = vadd.f32 0.0, %v1324
        %v1326 = vpop.f32.mrb[0].mxu0
        %1327 = vdwg.mxu0
        %v1328 = vrcp.pop %v1120
        %v1329 = vrcp.pop %v1123
        %v1330 = vrcp.pop %v1126
        %v1331 = vrcp.pop %v1129
        %v1332 = vrcp.pop %v1132
        %v1333 = vrcp.pop %v1135
        %v1334 = vrcp.pop %v1138
        %v1335 = vrcp.pop %v1141
        %v1336 = vrcp.pop %v1144
        %v1337 = vrcp.pop %v1147
        %v1338 = vrcp.pop %v1150
        %v1339 = vrcp.pop %v1153
        %v1340 = vrcp.pop %v1156
        %v1341 = vrcp.pop %v1159
        %v1342 = vrcp.pop %v1162
        %v1343 = vrcp.pop %v1165
        %v1344 = vmul.f32 %v1221, %v1328
        %v1345 = vmul.f32 %v1224, %v1329
        %v1346 = vmul.f32 %v1229, %v1330
        %v1347 = vmul.f32 %v1232, %v1331
        %v1348 = vmul.f32 %v1237, %v1332
        %v1349 = vmul.f32 %v1240, %v1333
        %v1350 = vmul.f32 %v1245, %v1334
        %v1351 = vmul.f32 %v1248, %v1335
        %v1352 = vmul.f32 %v1298, %v1336
        %v1353 = vmul.f32 %v1301, %v1337
        %v1354 = vmul.f32 %v1306, %v1338
        %v1355 = vmul.f32 %v1309, %v1339
        %v1356 = vmul.f32 %v1314, %v1340
        %v1357 = vmul.f32 %v1317, %v1341
        %v1358 = vmul.f32 %v1322, %v1342
        %v1359 = vmul.f32 %v1325, %v1343
        %1360 = vst.msk [vmem:[%s162] sm:$0xff] %vm780, %v1344
        %1361 = vst.msk [vmem:[%s162 + $0x8] sm:$0xff] %vm780, %v1345
        %1362 = vst.msk [vmem:[%s162 + $0x10] sm:$0xff] %vm780, %v1346
        %1363 = vst.msk [vmem:[%s162 + $0x18] sm:$0xff] %vm780, %v1347
        %1364 = vst.msk [vmem:[%s162 + $0x20] sm:$0xff] %vm780, %v1348
        %1365 = vst.msk [vmem:[%s162 + $0x28] sm:$0xff] %vm780, %v1349
        %1366 = vst.msk [vmem:[%s162 + $0x30] sm:$0xff] %vm780, %v1350
        %1367 = vst.msk [vmem:[%s162 + $0x38] sm:$0xff] %vm780, %v1351
        %1368 = vst.msk [vmem:[%s162 + $0x40] sm:$0xff] %vm780, %v1352
        %1369 = vst.msk [vmem:[%s162 + $0x48] sm:$0xff] %vm780, %v1353
        %1370 = vst.msk [vmem:[%s162 + $0x50] sm:$0xff] %vm780, %v1354
        %1371 = vst.msk [vmem:[%s162 + $0x58] sm:$0xff] %vm780, %v1355
        %1372 = vst.msk [vmem:[%s162 + $0x60] sm:$0xff] %vm780, %v1356
        %1373 = vst.msk [vmem:[%s162 + $0x68] sm:$0xff] %vm780, %v1357
        %1374 = vst.msk [vmem:[%s162 + $0x70] sm:$0xff] %vm780, %v1358
        %1375 = vst.msk [vmem:[%s162 + $0x78] sm:$0xff] %vm780, %v1359
        %s1376 = sand.u32 %s74, 1
        %s1377 = scalar_lea.sflag [#allocation4], %s1376
        %s1378 = sand.u32 %s74, 1
        %s1379 = smul.addr %s1378, 128
        %s1380 = scalar_lea.vmem [#allocation5], %s1379
        // Predicated region
        $region33: #{tpu_custom_call.1} parent=27 // pred_check
          %p1381 = pneg %p84
        $region34: #{tpu_custom_call.1} parent=27 // pred_check_branch
          %1383 = sbr.rel (%p1381) target = $region36
        $region35: #{tpu_custom_call.1} parent=27 // pred_region
          %s1384 = smul.u32 2, %s19
          %s1386 = ssub.s32 2048, 2048
          %1387 = vsyncadd %s1377, %s1386
          %s1388 = smul.addr %s1384, 8
          %s1389 = smul.addr %s1388, 128
          %s1390 = scalar_lea.hbm %s2, %s1389
          %s1391 = sshll.u32 %s1380, 4
          %s1392 = int_to_ptr.vmem [resolvable:$true] %s1391
          %1397 = dma.vmem_to_hbm [thread:$0]  %s1392, 2048, %s1390, %s1377, 128, 128, 8
        $region36: #{tpu_custom_call.1} parent=27 // pred_fallthru
          _
      $region28: #{tpu_custom_call.1} parent=5 // pred_fallthru
        _
      %p1398 = scmp.le.s32.totalorder 2, %s14
      // Predicated region
      $region37: #{tpu_custom_call.1} parent=5 // pred_check
        %p1399 = pneg %p1398
      $region38: #{tpu_custom_call.1} parent=5 // pred_check_branch
        %1401 = sbr.rel (%p1399) target = $region40
      $region39: #{tpu_custom_call.1} parent=5 // pred_region
        %s1402 = ssub.s32 %s14, 2
        // Predicated region
        $region41: #{tpu_custom_call.1} parent=39 // pred_check
          %p1403 = pneg %p90
        $region42: #{tpu_custom_call.1} parent=39 // pred_check_branch
          %1405 = sbr.rel (%p1403) target = $region44
        $region43: #{tpu_custom_call.1} parent=39 // pred_region
          %s1406 = sand.u32 %s75, 1
          %s1407 = scalar_lea.sflag [#allocation4], %s1406
          %s1408 = sand.u32 %s75, 1
          %s1409 = smul.addr %s1408, 128
          %s1410 = scalar_lea.vmem [#allocation5], %s1409
          %1411 = dma.done %s1407, 2048
        $region44: #{tpu_custom_call.1} parent=39 // pred_fallthru
          _
      $region40: #{tpu_custom_call.1} parent=5 // pred_fallthru
        _
    $region6: #{tpu_custom_call.1} parent=1 // loop_footer
      %s18 = sadd.s32 1, %s14
    $region7: #{tpu_custom_call.1} parent=1 // loop_footer_branch
      %13 = sbr.rel target = $region3
    $region8: #{tpu_custom_call.1} parent=1 // loop_exit
      _
    %1412 = vsyncpa [#allocation3], 1
    %s1413 = scalar_lea.sflag [#allocation3], 1
    %1414 = vsyncpa %s1413, 1
    %1415 = vsyncpa [#allocation4], 1
    %s1416 = scalar_lea.sflag [#allocation4], 1
    %1417 = vsyncpa %s1416, 1

</llo_original>
